<compile_context>
chip_gen: v5e
topology: v5e:2x2
jax: 0.10.0
libtpu: 0.0.40
codegen_flags: <defaults>
</compile_context>

<pallas_src>
import functools

import jax
import jax.numpy as jnp
from jax.experimental import pallas as pl
from jax.experimental.pallas import tpu as pltpu


def _euclid_loss_kernel(p_ref, l_ref, o_ref, acc_ref, *, hw, tm):
    """One grid step (n, j): process a (C, TM) tile of batch row n.

    p_ref, l_ref : (C, TM) VMEM tiles (channel on sublanes, positions on lanes)
    o_ref        : (8, 128) f32 output block for batch row n (partial sum,
                   broadcast across the block; read back as [0, 0])
    acc_ref      : (1, TM) f32 VMEM scratch, lane-dense running sum of exp(dist)
    """
    j = pl.program_id(1)

    @pl.when(j == 0)
    def _init():
        acc_ref[...] = jnp.zeros_like(acc_ref)

    p = p_ref[...].astype(jnp.float32)
    l = l_ref[...].astype(jnp.float32)
    diff = p - l
    # Reduce over the channel (sublane) axis -> per-position squared distance.
    sq_dist = jnp.sum(diff * diff, axis=0, keepdims=True)      # (1, TM)
    e = jnp.exp(jnp.sqrt(sq_dist))                              # (1, TM), EUP

    if hw % tm != 0:
        # Tail tile: mask lanes past HW before accumulating (garbage in the
        # padded block region is select-ed away, never added).
        lane = jax.lax.broadcasted_iota(jnp.int32, (1, tm), 1)
        e = jnp.where(j * tm + lane < hw, e, 0.0)

    # Pure VPU add into the lane-dense accumulator — no per-step cross-lane
    # reduce, no loop-carried scalar dependency.
    acc_ref[...] = acc_ref[...] + e

    @pl.when(j == pl.num_programs(1) - 1)
    def _finalize():
        total = jnp.sum(acc_ref[...])                           # one XLU reduce
        o_ref[...] = jnp.broadcast_to(total, o_ref.shape)


def euclidean_distance_loss(predictions, labels, *,
                            target_block_bytes=2 * 1024 * 1024):
    """Pallas implementation of EuclideanDistanceLoss.forward.

    predictions, labels: same shape (N, C, ...), reduction over axis=1.
    Returns a scalar float32 loss.
    """
    assert predictions.shape == labels.shape, (
        "Shape mismatch between predictions and labels")
    shape = predictions.shape
    assert len(shape) >= 2, "need at least (N, C, ...)"

    N, C = int(shape[0]), int(shape[1])
    hw = 1
    for d in shape[2:]:
        hw *= int(d)
    hw = max(hw, 1)

    # Free, contiguous reshape — no HBM relayout.
    p3 = predictions.reshape(N, C, hw)
    l3 = labels.reshape(N, C, hw)

    # --- Tile sizing: big lane tiles to amortize per-step overhead, capped so
    # the double-buffered footprint fits VMEM on all generations (v7x: 64 MiB).
    itemsize = int(jnp.dtype(predictions.dtype).itemsize)
    tm_cap = (target_block_bytes // (C * itemsize)) // 128 * 128
    tm_cap = max(tm_cap, 512)              # floor for amortization / tiny C
    hw_pad = -(-hw // 128) * 128           # round HW up to a lane multiple
    tm = max(128, min(tm_cap, hw_pad))
    num_j = -(-hw // tm)                   # cdiv; tail handled by masking
    grid = (N, num_j)

    # VMEM budget: 2 inputs x 2 pipeline buffers x block + accumulator + out.
    block_bytes = C * tm * itemsize
    footprint = 4 * block_bytes + tm * 4 + 2 * 8 * 128 * 4
    vmem_limit = int(min(48 * 1024 * 1024,
                         max(32 * 1024 * 1024, int(1.25 * footprint))))

    kernel = functools.partial(_euclid_loss_kernel, hw=hw, tm=tm)

    out = pl.pallas_call(
        kernel,
        out_shape=jax.ShapeDtypeStruct((N * 8, 128), jnp.float32),
        grid_spec=pltpu.PrefetchScalarGridSpec(
            num_scalar_prefetch=0,
            grid=grid,
            in_specs=[
                # Leading batch dim squeezed: kernel sees a (C, TM) tile.
                pl.BlockSpec((None, C, tm), lambda n, j: (n, 0, j)),
                pl.BlockSpec((None, C, tm), lambda n, j: (n, 0, j)),
            ],
            # Lane-dense (8, 128) partial-sum block per batch row n.
            out_specs=pl.BlockSpec((8, 128), lambda n, j: (n, 0)),
            scratch_shapes=[pltpu.VMEM((1, tm), jnp.float32)],
        ),
        compiler_params=pltpu.CompilerParams(
            # Batch rows are independent -> parallel (2 TCs on v7x);
            # the HW-tile axis accumulates -> arbitrary.
            dimension_semantics=("parallel", "arbitrary"),
            vmem_limit_bytes=vmem_limit,
        ),
    )(p3, l3)

    partials = out.reshape(N, 8, 128)[:, 0, 0]     # one partial sum per batch row
    return jnp.sum(partials) / jnp.float32(N * hw)


def _reference_loss(predictions, labels):
    squared_diff = (predictions - labels) ** 2
    squared_distances = jnp.sum(squared_diff, axis=1)
    distances = jnp.sqrt(squared_distances)
    return jnp.mean(jnp.exp(distances))


if __name__ == "__main__":
    key = jax.random.PRNGKey(0)
    k1, k2, k3, k4, k5, k6 = jax.random.split(key, 6)

    # 1) Canonical NCHW case: batch=2, channels=4, spatial=16x16.
    preds = jax.random.normal(k1, (2, 4, 16, 16), dtype=jnp.float32) * 0.1
    labels = jax.random.normal(k2, (2, 4, 16, 16), dtype=jnp.float32) * 0.1
    loss = jax.block_until_ready(euclidean_distance_loss(preds, labels))
    ref = jax.block_until_ready(_reference_loss(preds, labels))
    assert jnp.allclose(loss, ref, rtol=1e-5, atol=1e-5), (loss, ref)

    # 2) HW not a multiple of 128 -> exercises the tail mask.
    p2 = jax.random.normal(k3, (2, 4, 10, 10), dtype=jnp.float32) * 0.1
    l2 = jax.random.normal(k4, (2, 4, 10, 10), dtype=jnp.float32) * 0.1
    loss2 = jax.block_until_ready(euclidean_distance_loss(p2, l2))
    ref2 = jax.block_until_ready(_reference_loss(p2, l2))
    assert jnp.allclose(loss2, ref2, rtol=1e-5, atol=1e-5), (loss2, ref2)

    # 3) Multiple HW tiles per batch row (small block budget) + ragged tail.
    p3 = jax.random.normal(k5, (1, 4, 32, 40), dtype=jnp.float32) * 0.1
    l3 = jax.random.normal(k6, (1, 4, 32, 40), dtype=jnp.float32) * 0.1
    loss3 = jax.block_until_ready(
        euclidean_distance_loss(p3, l3, target_block_bytes=8192))
    ref3 = jax.block_until_ready(_reference_loss(p3, l3))
    assert jnp.allclose(loss3, ref3, rtol=1e-5, atol=1e-5), (loss3, ref3)

    print("KERNEL_OK")
</pallas_src>

<mosaic_0001>
module attributes {stable_mosaic.version = 11 : i64} {
  func.func @_euclid_loss_kernel(%arg0: i32, %arg1: i32, %arg2: memref<1x4x256xf32, #tpu.memory_space<vmem>>, %arg3: memref<1x4x256xf32, #tpu.memory_space<vmem>>, %arg4: memref<8x128xf32, #tpu.memory_space<vmem>>, %arg5: memref<1x256xf32, #tpu.memory_space<vmem>>) attributes {dimension_semantics = [#tpu.dimension_semantics<parallel>, #tpu.dimension_semantics<arbitrary>], iteration_bounds = array<i64: 2, 1>, scalar_prefetch = 0 : i64, scratch_operands = 1 : i64, tpu.core_type = #tpu.core_type<tc>, window_params = [{transform_indices = @transform_0, window_bounds = array<i64: 1, 4, 256>}, {transform_indices = @transform_1, window_bounds = array<i64: 1, 4, 256>}, {transform_indices = @transform_2, window_bounds = array<i64: 8, 128>}]} {
    %c0_i32 = arith.constant 0 : i32
    %0 = arith.cmpi eq, %arg1, %c0_i32 : i32
    %1 = arith.extui %0 : i1 to i32
    %c0_i32_0 = arith.constant 0 : i32
    %2 = arith.cmpi ne, %1, %c0_i32_0 : i32
    scf.if %2 {
      %cst_12 = arith.constant 0.000000e+00 : f32
      %19 = vector.broadcast %cst_12 : f32 to vector<1x256xf32>
      %c0_13 = arith.constant 0 : index
      %c0_14 = arith.constant 0 : index
      %20 = vector.load %arg5[%c0_13, %c0_14] : memref<1x256xf32, #tpu.memory_space<vmem>>, vector<1x256xf32>
      tpu.vector_store %arg5[%c0_13, %c0_14], %19 {strides = array<i32>} : memref<1x256xf32, #tpu.memory_space<vmem>>, vector<1x256xf32>,
    } else {
    }
    %c0 = arith.constant 0 : index
    %c0_1 = arith.constant 0 : index
    %c0_2 = arith.constant 0 : index
    %3 = vector.load %arg2[%c0, %c0_1, %c0_2] : memref<1x4x256xf32, #tpu.memory_space<vmem>>, vector<1x4x256xf32>
    %4 = vector.shape_cast %3 : vector<1x4x256xf32> to vector<4x256xf32>
    %c0_3 = arith.constant 0 : index
    %c0_4 = arith.constant 0 : index
    %c0_5 = arith.constant 0 : index
    %5 = vector.load %arg3[%c0_3, %c0_4, %c0_5] : memref<1x4x256xf32, #tpu.memory_space<vmem>>, vector<1x4x256xf32>
    %6 = vector.shape_cast %5 : vector<1x4x256xf32> to vector<4x256xf32>
    %7 = arith.subf %4, %6 : vector<4x256xf32>
    %8 = arith.mulf %7, %7 : vector<4x256xf32>
    %cst = arith.constant dense<0.000000e+00> : vector<256xf32>
    %9 = vector.multi_reduction <add>, %8, %cst [0] : vector<4x256xf32> to vector<256xf32>
    %10 = vector.shape_cast %9 : vector<256xf32> to vector<1x256xf32>
    %11 = math.sqrt %10 : vector<1x256xf32>
    %12 = math.exp %11 : vector<1x256xf32>
    %c0_6 = arith.constant 0 : index
    %c0_7 = arith.constant 0 : index
    %13 = vector.load %arg5[%c0_6, %c0_7] : memref<1x256xf32, #tpu.memory_space<vmem>>, vector<1x256xf32>
    %14 = arith.addf %13, %12 : vector<1x256xf32>
    %c0_8 = arith.constant 0 : index
    %c0_9 = arith.constant 0 : index
    %15 = vector.load %arg5[%c0_8, %c0_9] : memref<1x256xf32, #tpu.memory_space<vmem>>, vector<1x256xf32>
    tpu.vector_store %arg5[%c0_8, %c0_9], %14 {strides = array<i32>} : memref<1x256xf32, #tpu.memory_space<vmem>>, vector<1x256xf32>,
    %c0_i32_10 = arith.constant 0 : i32
    %16 = arith.cmpi eq, %arg1, %c0_i32_10 : i32
    %17 = arith.extui %16 : i1 to i32
    %c0_i32_11 = arith.constant 0 : i32
    %18 = arith.cmpi ne, %17, %c0_i32_11 : i32
    scf.if %18 {
      %c0_12 = arith.constant 0 : index
      %c0_13 = arith.constant 0 : index
      %19 = vector.load %arg5[%c0_12, %c0_13] : memref<1x256xf32, #tpu.memory_space<vmem>>, vector<1x256xf32>
      %20 = vector.shape_cast %19 : vector<1x256xf32> to vector<1x1x256xf32>
      %cst_14 = arith.constant dense<0.000000e+00> : vector<1xf32>
      %21 = vector.multi_reduction <add>, %20, %cst_14 [1, 2] : vector<1x1x256xf32> to vector<1xf32>
      %22 = vector.shape_cast %21 : vector<1xf32> to vector<1x1x1xf32>
      %23 = vector.extract %22[0, 0, 0] : f32 from vector<1x1x1xf32>
      %24 = vector.broadcast %23 : f32 to vector<8x128xf32>
      %c0_15 = arith.constant 0 : index
      %c0_16 = arith.constant 0 : index
      %25 = vector.load %arg4[%c0_15, %c0_16] : memref<8x128xf32, #tpu.memory_space<vmem>>, vector<8x128xf32>
      tpu.vector_store %arg4[%c0_15, %c0_16], %24 {strides = array<i32>} : memref<8x128xf32, #tpu.memory_space<vmem>>, vector<8x128xf32>,
    } else {
    }
    return
  }
  func.func @transform_0(%arg0: i32, %arg1: i32) -> (i32, i32, i32) {
    %c0_i32 = arith.constant 0 : i32
    %c0_i32_0 = arith.constant 0 : i32
    return %arg0, %c0_i32, %arg1 : i32, i32, i32
  }
  func.func @transform_1(%arg0: i32, %arg1: i32) -> (i32, i32, i32) {
    %c0_i32 = arith.constant 0 : i32
    %c0_i32_0 = arith.constant 0 : i32
    return %arg0, %c0_i32, %arg1 : i32, i32, i32
  }
  func.func @transform_2(%arg0: i32, %arg1: i32) -> (i32, i32) {
    %c0_i32 = arith.constant 0 : i32
    %c0_i32_0 = arith.constant 0 : i32
    return %arg0, %c0_i32 : i32, i32
  }
}

</mosaic_0001>

<llo_original>
// kernel: tpu_custom_call.1
$region0: #{tpu_custom_call.1}
  #allocation0 [shape = 'u32[]', space=smem, size = 0x4, offset = 0x4, fixed_abs, tag = 'smem constant byte address 0x4 - core index']
  #allocation1 [shape = 'u32[72,128]{1,0:T(1,128)}', space=vmem, size = 0x9000, scoped, tag = 'internal scratch']
  #allocation2 [shape = 'f32[1,256]{1,0:T(1,128)}', space=vmem, size = 0x400, scoped, tag = 'scratch operand']
  %s0 = inlined_call_operand.hbm [shape: f32[2,4,256], index: 0, kind: input, shape index: {}]
  %s1 = inlined_call_operand.hbm [shape: f32[2,4,256], index: 1, kind: input, shape index: {}]
  %s2 = inlined_call_operand.hbm [shape: f32[16,128], index: 2, kind: output, shape index: {}]
  %s3 = sld [smem:[#allocation0]]
  $region57: #{tpu_custom_call.1} parent=0
    _
  %s5 = ssub.s32 1, %s3
  %s6 = scalar_select 0, %s5, %s3
  $region1: #{tpu_custom_call.1} parent=0
    #allocation3 [shape = 'u8[8192]{0}', space=vmem, size = 0x2000, scoped, tag = 'input window, operand 0']
    #allocation4 [shape = 's32[2]{0}', space=sflag, size = 0x8, scoped, tag = 'scoped memory for tpu_custom_call.1']
    #allocation5 [shape = 's32[2]{0}', space=sflag, size = 0x8, scoped, tag = 'scoped memory for tpu_custom_call.1']
    #allocation6 [shape = 'u8[8192]{0}', space=vmem, size = 0x2000, scoped, tag = 'input window, operand 1']
    #allocation7 [shape = 's32[2]{0}', space=sflag, size = 0x8, scoped, tag = 'scoped memory for tpu_custom_call.1']
    #allocation8 [shape = 'u8[8192]{0}', space=vmem, size = 0x2000, scoped, tag = 'output window, operand 0']
    %7 = vsyncpa [#allocation4], 0
    %s8 = scalar_lea.sflag [#allocation4], 1
    %9 = vsyncpa %s8, 0
    %10 = vsyncpa [#allocation7], 0
    %s11 = scalar_lea.sflag [#allocation7], 1
    %12 = vsyncpa %s11, 0
    %13 = vsyncpa [#allocation5], 0
    %s14 = scalar_lea.sflag [#allocation5], 1
    %15 = vsyncpa %s14, 0
    loop: start=0, step=1, limit=4
    $region2: #{tpu_custom_call.1} parent=1 // loop_pre_header
      _
    $region3: #{tpu_custom_call.1} parent=1 // loop_header
      %s17 = sphi 0, %s21
      %p18 = scmp.ge.s32.totalorder %s17, 4
      %s24 = sphi 0, %s36
      %s25 = sphi 0, %s32
      %s26 = sphi 0, %s24
      %s27 = sphi 0, %s25
      %s28 = sphi 0, %s26
      %s29 = sphi 0, %s27
      %s41 = sphi 0, %s43
      %s44 = sphi 0, %s41
      %s45 = sphi 0, %s44
      %s61 = sphi 0, %s45
      %s69 = sphi 0, %s71
      %s72 = sphi 0, %s69
      %s73 = sphi 0, %s72
      %s89 = sphi 0, %s73
      %s95 = sphi 0, %s97
      %s98 = sphi 0, %s95
      %s99 = sphi 0, %s98
      %s115 = sphi 0, %s99
    $region4: #{tpu_custom_call.1} parent=1 // loop_header_branch
      %20 = sbr.rel (%p18) target = $region8
    $region5: #{tpu_custom_call.1} parent=1 // loop_body
      %s22 = ssub.s32 %s17, 1
      %s23 = ssub.s32 %s17, 2
      %s30 = sadd.s32 1, %s25
      %p31 = scmp.ge.s32.totalorder %s30, 1
      %s32 = scalar_select %p31, 0, %s30
      %s33 = sadd.s32 1, %s24
      %s34 = scalar_select %p31, %s33, %s24
      %p35 = scmp.ge.s32.totalorder %s34, 2
      %s36 = scalar_select %p35, 0, %s34
      %s37 = ssub.s32 %s24, %s36
      %s38 = ssub.s32 %s25, %s32
      %s39 = sor.u32 %s37, %s38
      %p40 = scmp.eq.s32.totalorder %s39, 0
      %s42 = sadd.s32 %s41, 1
      %s43 = scalar_select %p40, %s41, %s42
      %p46 = pneg %p40
      %p47 = scmp.eq.s32.totalorder %s17, 1
      %p48 = por %p46, %p47
      %p49 = scmp.ne.s32.totalorder %s41, %s44
      %p50 = scmp.eq.s32.totalorder %s17, 0
      %p51 = por %p49, %p50
      %p52 = scmp.ne.s32.totalorder %s41, %s44
      %p53 = scmp.eq.s32.totalorder %s22, 1
      %p54 = por %p52, %p53
      %p55 = scmp.ne.s32.totalorder %s44, %s45
      %p56 = scmp.eq.s32.totalorder %s22, 0
      %p57 = por %p55, %p56
      %p58 = scmp.ne.s32.totalorder %s44, %s45
      %p59 = scmp.eq.s32.totalorder %s23, 1
      %p60 = por %p58, %p59
      %p62 = scmp.ne.s32.totalorder %s45, %s61
      %p63 = scmp.eq.s32.totalorder %s23, 0
      %p64 = por %p62, %p63
      %s65 = ssub.s32 %s24, %s36
      %s66 = ssub.s32 %s25, %s32
      %s67 = sor.u32 %s65, %s66
      %p68 = scmp.eq.s32.totalorder %s67, 0
      %s70 = sadd.s32 %s69, 1
      %s71 = scalar_select %p68, %s69, %s70
      %p74 = pneg %p68
      %p75 = scmp.eq.s32.totalorder %s17, 1
      %p76 = por %p74, %p75
      %p77 = scmp.ne.s32.totalorder %s69, %s72
      %p78 = scmp.eq.s32.totalorder %s17, 0
      %p79 = por %p77, %p78
      %p80 = scmp.ne.s32.totalorder %s69, %s72
      %p81 = scmp.eq.s32.totalorder %s22, 1
      %p82 = por %p80, %p81
      %p83 = scmp.ne.s32.totalorder %s72, %s73
      %p84 = scmp.eq.s32.totalorder %s22, 0
      %p85 = por %p83, %p84
      %p86 = scmp.ne.s32.totalorder %s72, %s73
      %p87 = scmp.eq.s32.totalorder %s23, 1
      %p88 = por %p86, %p87
      %p90 = scmp.ne.s32.totalorder %s73, %s89
      %p91 = scmp.eq.s32.totalorder %s23, 0
      %p92 = por %p90, %p91
      %s93 = ssub.s32 %s24, %s36
      %p94 = scmp.eq.s32.totalorder %s93, 0
      %s96 = sadd.s32 %s95, 1
      %s97 = scalar_select %p94, %s95, %s96
      %p100 = pneg %p94
      %p101 = scmp.eq.s32.totalorder %s17, 1
      %p102 = por %p100, %p101
      %p103 = scmp.ne.s32.totalorder %s95, %s98
      %p104 = scmp.eq.s32.totalorder %s17, 0
      %p105 = por %p103, %p104
      %p106 = scmp.ne.s32.totalorder %s95, %s98
      %p107 = scmp.eq.s32.totalorder %s22, 1
      %p108 = por %p106, %p107
      %p109 = scmp.ne.s32.totalorder %s98, %s99
      %p110 = scmp.eq.s32.totalorder %s22, 0
      %p111 = por %p109, %p110
      %p112 = scmp.ne.s32.totalorder %s98, %s99
      %p113 = scmp.eq.s32.totalorder %s23, 1
      %p114 = por %p112, %p113
      %p116 = scmp.ne.s32.totalorder %s99, %s115
      %p117 = scmp.eq.s32.totalorder %s23, 0
      %p118 = por %p116, %p117
      %p119 = scmp.le.s32.totalorder 1, %s17
      %p120 = scmp.lt.s32.totalorder %s17, 3
      %p121 = pnand %p119, %p120
      %p122 = pneg %p121
      // Predicated region
      $region9: #{tpu_custom_call.1} parent=5 // pred_check
        _
      $region10: #{tpu_custom_call.1} parent=5 // pred_check_branch
        %124 = sbr.rel (%p121) target = $region12
      $region11: #{tpu_custom_call.1} parent=5 // pred_region
        %s125 = ssub.s32 %s17, 1
      $region12: #{tpu_custom_call.1} parent=5 // pred_fallthru
        _
      %p126 = scmp.lt.s32.totalorder %s17, 2
      // Predicated region
      $region13: #{tpu_custom_call.1} parent=5 // pred_check
        %p127 = pneg %p126
      $region14: #{tpu_custom_call.1} parent=5 // pred_check_branch
        %129 = sbr.rel (%p127) target = $region16
      $region15: #{tpu_custom_call.1} parent=5 // pred_region
        // Predicated region
        $region17: #{tpu_custom_call.1} parent=15 // pred_check
          %p130 = pneg %p51
        $region18: #{tpu_custom_call.1} parent=15 // pred_check_branch
          %132 = sbr.rel (%p130) target = $region20
        $region19: #{tpu_custom_call.1} parent=15 // pred_region
          %s133 = sand.u32 %s41, 1
          %s134 = scalar_lea.sflag [#allocation4], %s133
          %s135 = sand.u32 %s41, 1
          %s136 = smul.addr %s135, 8
          %s137 = scalar_lea.vmem [#allocation3], %s136
          %s138 = smul.u32 2, %s25
          %140 = vsyncadd %s134, 0
          %s141 = smul.addr %s24, 2
          %s142 = sadd.s32 %s138, %s141
          %s143 = smul.addr %s142, 4
          %s144 = scalar_lea.hbm %s0, %s143
          %s146 = sshll.u32 %s144, 4
          %s147 = int_to_ptr.hbm [resolvable:$true] %s146
          %s148 = sshll.u32 %s137, 4
          %s149 = int_to_ptr.vmem [resolvable:$true] %s148
          %151 = dma.hbm_to_vmem [thread:$0]  %s147, 128, %s149, %s134
        $region20: #{tpu_custom_call.1} parent=15 // pred_fallthru
          _
        // Predicated region
        $region21: #{tpu_custom_call.1} parent=15 // pred_check
          %p152 = pneg %p79
        $region22: #{tpu_custom_call.1} parent=15 // pred_check_branch
          %154 = sbr.rel (%p152) target = $region24
        $region23: #{tpu_custom_call.1} parent=15 // pred_region
          %s155 = sand.u32 %s69, 1
          %s156 = scalar_lea.sflag [#allocation7], %s155
          %s157 = sand.u32 %s69, 1
          %s158 = smul.addr %s157, 8
          %s159 = scalar_lea.vmem [#allocation6], %s158
          %s160 = smul.u32 2, %s25
          %162 = vsyncadd %s156, 0
          %s163 = smul.addr %s24, 2
          %s164 = sadd.s32 %s160, %s163
          %s165 = smul.addr %s164, 4
          %s166 = scalar_lea.hbm %s1, %s165
          %s168 = sshll.u32 %s166, 4
          %s169 = int_to_ptr.hbm [resolvable:$true] %s168
          %s170 = sshll.u32 %s159, 4
          %s171 = int_to_ptr.vmem [resolvable:$true] %s170
          %173 = dma.hbm_to_vmem [thread:$0]  %s169, 128, %s171, %s156
        $region24: #{tpu_custom_call.1} parent=15 // pred_fallthru
          _
      $region16: #{tpu_custom_call.1} parent=5 // pred_fallthru
        _
      %p174 = scmp.le.s32.totalorder 1, %s17
      %p175 = scmp.lt.s32.totalorder %s17, 3
      %p176 = pnand %p174, %p175
      %p177 = pneg %p176
      // Predicated region
      $region25: #{tpu_custom_call.1} parent=5 // pred_check
        _
      $region26: #{tpu_custom_call.1} parent=5 // pred_check_branch
        %179 = sbr.rel (%p176) target = $region28
      $region27: #{tpu_custom_call.1} parent=5 // pred_region
        %s180 = ssub.s32 %s17, 1
        %s181 = sand.u32 %s44, 1
        %s182 = scalar_lea.sflag [#allocation4], %s181
        %s183 = sand.u32 %s44, 1
        %s184 = smul.addr %s183, 8
        %s185 = scalar_lea.vmem [#allocation3], %s184
        // Predicated region
        $region29: #{tpu_custom_call.1} parent=27 // pred_check
          %p186 = pneg %p57
        $region30: #{tpu_custom_call.1} parent=27 // pred_check_branch
          %188 = sbr.rel (%p186) target = $region32
        $region31: #{tpu_custom_call.1} parent=27 // pred_region
          %190 = dma.done %s182, 128
        $region32: #{tpu_custom_call.1} parent=27 // pred_fallthru
          _
        %s191 = sand.u32 %s72, 1
        %s192 = scalar_lea.sflag [#allocation7], %s191
        %s193 = sand.u32 %s72, 1
        %s194 = smul.addr %s193, 8
        %s195 = scalar_lea.vmem [#allocation6], %s194
        // Predicated region
        $region33: #{tpu_custom_call.1} parent=27 // pred_check
          %p196 = pneg %p85
        $region34: #{tpu_custom_call.1} parent=27 // pred_check_branch
          %198 = sbr.rel (%p196) target = $region36
        $region35: #{tpu_custom_call.1} parent=27 // pred_region
          %200 = dma.done %s192, 128
        $region36: #{tpu_custom_call.1} parent=27 // pred_fallthru
          _
        %s201 = sand.u32 %s44, 1
        %s202 = scalar_lea.sflag [#allocation4], %s201
        %s203 = sand.u32 %s44, 1
        %s204 = smul.addr %s203, 8
        %s205 = scalar_lea.vmem [#allocation3], %s204
        %p206 = pneg %p57
        %p207 = pneg %p54
        %s208 = sand.u32 %s72, 1
        %s209 = scalar_lea.sflag [#allocation7], %s208
        %s210 = sand.u32 %s72, 1
        %s211 = smul.addr %s210, 8
        %s212 = scalar_lea.vmem [#allocation6], %s211
        %p213 = pneg %p85
        %p214 = pneg %p82
        %p215 = pneg %p111
        %p216 = pneg %p108
        %s217 = sand.u32 %s98, 1
        %s218 = scalar_lea.sflag [#allocation5], %s217
        %s219 = sand.u32 %s98, 1
        %s220 = smul.addr %s219, 8
        %s221 = scalar_lea.vmem [#allocation8], %s220
        %s222 = smul.u32 2, %s27
        %s223 = smul.u32 2, %s27
        %p224 = scmp.eq.s32.totalorder %s27, 0
        // Predicated region
        $region37: #{tpu_custom_call.1} parent=27 // pred_check
          %p225 = pneg %p224
        $region38: #{tpu_custom_call.1} parent=27 // pred_check_branch
          %227 = sbr.rel (%p225) target = $region40
        $region39: #{tpu_custom_call.1} parent=27 // pred_region
          %v228 = vlaneseq
          %vm229 = vcmp.ge.s32.totalorder %v228, 0
          %vm230 = vcmp.lt.s32.totalorder %v228, 256
          %vm231 = vmand %vm229, %vm230
          %232 = vst.msk [vmem:[#allocation2] sm:$0x3] %vm231, 0.0
        $region40: #{tpu_custom_call.1} parent=27 // pred_fallthru
          _
        %v233 = vld [vmem:[%s185] sm:$0xff]
        %v234 = vld [vmem:[%s195] sm:$0xff]
        %v235 = vsub.f32 %v233, %v234
        %v236 = vmul.f32 %v235, %v235
        %238 = vst [vmem:[#allocation1] ss:$2 sm:$0xff] %v236
        %v239 = vld.sshfl [vmem:[#allocation1] sm:$0xff pattern:$0x75316420]
        %v240 = vld.sshfl [vmem:[#allocation1 + $0x8] sm:$0xff pattern:$0x75316420]
        %vm243 = vcmask 1043456
        %v244 = vsel %vm243, %v239, 0.0
        %v245 = vrot.slane %v244, 4
        %v246 = vadd.f32 %v244, %v245
        %v247 = vrot.slane %v246, 2
        %v248 = vadd.f32 %v246, %v247
        %v249 = vrot.slane %v248, 1
        %v250 = vadd.f32 %v248, %v249
        %v251 = vsel %vm243, %v240, 0.0
        %v252 = vrot.slane %v251, 4
        %v253 = vadd.f32 %v251, %v252
        %v254 = vrot.slane %v253, 2
        %v255 = vadd.f32 %v253, %v254
        %v256 = vrot.slane %v255, 1
        %v257 = vadd.f32 %v255, %v256
        %v258 = vrsqrt.pop %v250
        %v259 = vmul.f32 %v258, %v250
        %v260 = vmul.f32 %v259, %v258
        %v261 = vmul.f32 0.5, %v260
        %v262 = vsub.f32 1.5, %v261
        %v263 = vmul.f32 %v258, %v262
        %v264 = vmul.f32 %v250, %v263
        %vm265 = vcmp.eq.f32.partialorder %v250, inf
        %v266 = vsel %vm265, %v250, %v264
        %vm267 = vcmp.eq.f32.partialorder %v250, 0.0
        %v268 = vand.u32 %v250, 2147483648
        %v269 = vsel %vm267, %v268, %v266
        %v270 = vrsqrt.pop %v257
        %v271 = vmul.f32 %v270, %v257
        %v272 = vmul.f32 %v271, %v270
        %v273 = vmul.f32 0.5, %v272
        %v274 = vsub.f32 1.5, %v273
        %v275 = vmul.f32 %v270, %v274
        %v276 = vmul.f32 %v257, %v275
        %vm277 = vcmp.eq.f32.partialorder %v257, inf
        %v278 = vsel %vm277, %v257, %v276
        %vm279 = vcmp.eq.f32.partialorder %v257, 0.0
        %v280 = vand.u32 %v257, 2147483648
        %v281 = vsel %vm279, %v280, %v278
        %v282 = vmul.f32 %v269, 1.442695
        %v283 = vpow.pop %v282
        %v284 = vmul.f32 %v281, 1.442695
        %v285 = vpow.pop %v284
        %v286 = vld [vmem:[#allocation2] sm:$0x3]
        %v289 = vrot.slane %v285, 7
        %vm290 = vcmask 1040384
        %v291 = vsel %vm290, %v283, %v289
        %v293 = vadd.f32 %v286, %v291
        %v294 = vlaneseq
        %vm295 = vcmp.ge.s32.totalorder %v294, 0
        %vm296 = vcmp.lt.s32.totalorder %v294, 256
        %vm297 = vmand %vm295, %vm296
        %298 = vst.msk [vmem:[#allocation2] sm:$0x3] %vm297, %v293
        // Predicated region
        $region41: #{tpu_custom_call.1} parent=27 // pred_check
          %p299 = pneg %p224
        $region42: #{tpu_custom_call.1} parent=27 // pred_check_branch
          %301 = sbr.rel (%p299) target = $region44
        $region43: #{tpu_custom_call.1} parent=27 // pred_region
          %v302 = vld [vmem:[#allocation2] sm:$0x3]
          %v304 = vperm.slane %v302, 0
          %v305 = vperm.slane %v302, 1
          %v308 = vsel %vm290, %v304, 0.0
          %v309 = vsel %vm290, %v305, 0.0
          %v310 = vadd.f32 %v308, %v309
          %311 = vadd.xlane.f32.xlu0 %v310
          %v312 = vpop.xlane.xlu0 %311
          %v313 = vrot.slane %v312, 4
          %v314 = vadd.f32 %v312, %v313
          %v315 = vrot.slane %v314, 2
          %v316 = vadd.f32 %v314, %v315
          %v317 = vrot.slane %v316, 1
          %v318 = vadd.f32 %v316, %v317
          %s319 = vtos %v318
          %v320 = vstv %s319
          %321 = vst [vmem:[%s221] sm:$0xff] %v320
        $region44: #{tpu_custom_call.1} parent=27 // pred_fallthru
          _
        %s322 = sand.u32 %s98, 1
        %s323 = scalar_lea.sflag [#allocation5], %s322
        %s324 = sand.u32 %s98, 1
        %s325 = smul.addr %s324, 8
        %s326 = scalar_lea.vmem [#allocation8], %s325
        // Predicated region
        $region45: #{tpu_custom_call.1} parent=27 // pred_check
          %p327 = pneg %p108
        $region46: #{tpu_custom_call.1} parent=27 // pred_check_branch
          %329 = sbr.rel (%p327) target = $region48
        $region47: #{tpu_custom_call.1} parent=27 // pred_region
          %331 = vsyncadd %s323, 0
          %s332 = smul.addr %s26, 8
          %s333 = scalar_lea.hbm %s2, %s332
          %s335 = sshll.u32 %s326, 4
          %s336 = int_to_ptr.vmem [resolvable:$true] %s335
          %s337 = sshll.u32 %s333, 4
          %s338 = int_to_ptr.hbm [resolvable:$true] %s337
          %340 = dma.vmem_to_hbm [thread:$0]  %s336, 128, %s338, %s323
        $region48: #{tpu_custom_call.1} parent=27 // pred_fallthru
          _
      $region28: #{tpu_custom_call.1} parent=5 // pred_fallthru
        _
      %p341 = scmp.le.s32.totalorder 2, %s17
      // Predicated region
      $region49: #{tpu_custom_call.1} parent=5 // pred_check
        %p342 = pneg %p341
      $region50: #{tpu_custom_call.1} parent=5 // pred_check_branch
        %344 = sbr.rel (%p342) target = $region52
      $region51: #{tpu_custom_call.1} parent=5 // pred_region
        %s345 = ssub.s32 %s17, 2
        // Predicated region
        $region53: #{tpu_custom_call.1} parent=51 // pred_check
          %p346 = pneg %p114
        $region54: #{tpu_custom_call.1} parent=51 // pred_check_branch
          %348 = sbr.rel (%p346) target = $region56
        $region55: #{tpu_custom_call.1} parent=51 // pred_region
          %s349 = sand.u32 %s99, 1
          %s350 = scalar_lea.sflag [#allocation5], %s349
          %s351 = sand.u32 %s99, 1
          %s352 = smul.addr %s351, 8
          %s353 = scalar_lea.vmem [#allocation8], %s352
          %355 = dma.done %s350, 128
        $region56: #{tpu_custom_call.1} parent=51 // pred_fallthru
          _
      $region52: #{tpu_custom_call.1} parent=5 // pred_fallthru
        _
    $region6: #{tpu_custom_call.1} parent=1 // loop_footer
      %s21 = sadd.s32 1, %s17
    $region7: #{tpu_custom_call.1} parent=1 // loop_footer_branch
      %16 = sbr.rel target = $region3
    $region8: #{tpu_custom_call.1} parent=1 // loop_exit
      _
    %356 = vsyncpa [#allocation4], 1
    %s357 = scalar_lea.sflag [#allocation4], 1
    %358 = vsyncpa %s357, 1
    %359 = vsyncpa [#allocation7], 1
    %s360 = scalar_lea.sflag [#allocation7], 1
    %361 = vsyncpa %s360, 1
    %362 = vsyncpa [#allocation5], 1
    %s363 = scalar_lea.sflag [#allocation5], 1
    %364 = vsyncpa %s363, 1

</llo_original>
